<compile_context>
chip_gen: v6e
topology: v6e:2x2x1
jax: 0.10.0
libtpu: 0.0.40
codegen_flags: <defaults>
</compile_context>

<pallas_src>
import jax
import jax.numpy as jnp
from jax.experimental import pallas as pl
from jax.experimental.pallas import tpu as pltpu

CHANNELS = 3     # the module hard-codes channels = 3
_MAX_BT = 8      # bound on the static per-step image unroll inside the kernel


def sobel_loss_kernel(pred_ref, label_ref, out_ref):
    """One grid step over `bt` images; writes sum(gx^2 + gy^2) for the block."""
    bt, nc, h, w = pred_ref.shape

    # Roll path needs lane/sublane-aligned extents; otherwise use pad-and-slice.
    use_roll = (h % 8 == 0) and (w % 128 == 0)

    if use_roll:
        # Edge masks implementing the conv's zero padding.  Hoisted out of the
        # image loop (JAX does not CSE broadcast_in_dim).
        row = jax.lax.broadcasted_iota(jnp.int32, (h, w), 0)
        col = jax.lax.broadcasted_iota(jnp.int32, (h, w), 1)
        top, bot = row == 0, row == h - 1
        left, right = col == 0, col == w - 1

    total = jnp.zeros((1, 1), jnp.float32)
    for i in range(bt):                      # bt <= _MAX_BT, small static unroll
        # Streaming channel reduction: subtract per channel in the input dtype
        # (bf16 VALU on v6e/v7x when inputs are bf16), accumulate in f32.
        d = (pred_ref[i, 0] - label_ref[i, 0]).astype(jnp.float32)
        for c in range(1, nc):
            d = d + (pred_ref[i, c] - label_ref[i, c]).astype(jnp.float32)

        if use_roll:
            # Zero-padded one-pixel shifts: XLU rotations + edge masks.
            d_up = jnp.where(top, 0.0, pltpu.roll(d, 1, axis=0))        # d[i-1, j]
            d_dn = jnp.where(bot, 0.0, pltpu.roll(d, h - 1, axis=0))    # d[i+1, j]

            # Separable Sobel: Kx = [1,2,1]^T x [1,0,-1], Ky = [1,0,-1]^T x [1,2,1].
            sv = d_up + 2.0 * d + d_dn       # vertical [1,2,1] smoothing (Sobel-X)
            dv = d_up - d_dn                 # vertical [1,0,-1] difference (Sobel-Y)

            sv_l = jnp.where(left, 0.0, pltpu.roll(sv, 1, axis=1))       # sv[i, j-1]
            sv_r = jnp.where(right, 0.0, pltpu.roll(sv, w - 1, axis=1))  # sv[i, j+1]
            dv_l = jnp.where(left, 0.0, pltpu.roll(dv, 1, axis=1))
            dv_r = jnp.where(right, 0.0, pltpu.roll(dv, w - 1, axis=1))

            gx = sv_l - sv_r                 # == conv_x(d)
            gy = dv_l + 2.0 * dv + dv_r      # == conv_y(d)
        else:
            # Narrow / unaligned tile fallback: 1-pixel zero halo built in VMEM.
            zc = jnp.zeros((h, 1), jnp.float32)
            zr = jnp.zeros((1, w + 2), jnp.float32)
            dp = jnp.concatenate([zc, d, zc], axis=1)        # (h,   w+2)
            dp = jnp.concatenate([zr, dp, zr], axis=0)       # (h+2, w+2)
            sv = dp[0:h, :] + 2.0 * dp[1:h + 1, :] + dp[2:h + 2, :]
            dv = dp[0:h, :] - dp[2:h + 2, :]
            gx = sv[:, 0:w] - sv[:, 2:w + 2]
            gy = dv[:, 0:w] + 2.0 * dv[:, 1:w + 1] + dv[:, 2:w + 2]

        total = total + jnp.sum(gx * gx + gy * gy, keepdims=True)

    out_ref[...] = total.reshape(out_ref.shape)


def _vmem_capacity_bytes():
    """Physical per-core VMEM (128 MiB on v5e/v6e, 64 MiB on v7x)."""
    try:
        return int(pltpu.get_tpu_info().vmem_capacity_bytes)
    except Exception:
        return 64 * 1024 * 1024   # most conservative of the targeted generations


def _choose_tiling(b, c, h, w, itemsize):
    """Images per grid step (bt) + an explicit scoped-VMEM limit."""
    cap = _vmem_capacity_bytes()
    in_bytes = 2 * 2 * c * h * w * itemsize   # pred + label blocks, double-buffered
    work_bytes = 8 * h * w * 4                # in-kernel f32 intermediates (d, shifts, gx/gy)
    per_img = in_bytes + work_bytes
    budget = int(0.70 * cap)

    bt = max(1, min(b, _MAX_BT, budget // max(per_img, 1)))
    if b >= 2:
        bt = min(bt, b // 2)   # >= 2 grid steps so v7x's second TensorCore has work
    while b % bt:              # bt must divide B
        bt -= 1

    est = bt * per_img + (4 << 20)            # + pipeline / compiler scratch margin
    vmem_limit = int(min(0.8 * cap, max(2 * est, 48 << 20)))
    return bt, vmem_limit


def sobel_criterium(pred, label, weight=1.0):
    """weight * (MSE(conv_x(pred), conv_x(label)) + MSE(conv_y(pred), conv_y(label)))."""
    B, C, H, W = pred.shape
    assert C == CHANNELS, "module hard-codes channels=3"
    assert label.shape == pred.shape

    bt, vmem_limit = _choose_tiling(B, C, H, W, jnp.dtype(pred.dtype).itemsize)
    G = B // bt

    partials = pl.pallas_call(
        sobel_loss_kernel,
        out_shape=jax.ShapeDtypeStruct((G, 1, 1), jnp.float32),
        grid_spec=pltpu.PrefetchScalarGridSpec(
            num_scalar_prefetch=0,
            grid=(G,),
            in_specs=[
                pl.BlockSpec((bt, C, H, W), lambda g: (g, 0, 0, 0)),
                pl.BlockSpec((bt, C, H, W), lambda g: (g, 0, 0, 0)),
            ],
            out_specs=pl.BlockSpec((1, 1, 1), lambda g: (g, 0, 0)),
        ),
        compiler_params=pltpu.CompilerParams(
            dimension_semantics=("parallel",),   # independent partial sums -> megacore-friendly
            vmem_limit_bytes=vmem_limit,
        ),
    )(pred, label)

    total = jnp.sum(partials)
    # MSELoss mean over B*C*H*W; all C output channels are identical, so the factor
    # C cancels:  weight * C * total / (B*C*H*W) = weight * total / (B*H*W).
    return jnp.float32(weight) * total / jnp.float32(B * H * W)


def _reference(pred, label, weight=1.0):
    """Pure-JAX reference matching the PyTorch module (criterion = MSELoss)."""
    kx = jnp.array([[1.0, 0.0, -1.0], [2.0, 0.0, -2.0], [1.0, 0.0, -1.0]], jnp.float32)
    ky = jnp.array([[1.0, 2.0, 1.0], [0.0, 0.0, 0.0], [-1.0, -2.0, -1.0]], jnp.float32)
    wx = jnp.broadcast_to(kx, (CHANNELS, CHANNELS, 3, 3))
    wy = jnp.broadcast_to(ky, (CHANNELS, CHANNELS, 3, 3))

    def conv(x, w):
        return jax.lax.conv_general_dilated(
            x.astype(jnp.float32), w, window_strides=(1, 1),
            padding=((1, 1), (1, 1)),
            dimension_numbers=("NCHW", "OIHW", "NCHW"))

    px, py = conv(pred, wx), conv(pred, wy)
    lx, ly = conv(label, wx), conv(label, wy)
    mse = lambda a, b: jnp.mean((a - b) ** 2)
    return weight * (mse(px, lx) + mse(py, ly))


if __name__ == "__main__":
    key = jax.random.PRNGKey(0)
    k1, k2 = jax.random.split(key)
    B, C, H, W = 2, 3, 16, 16  # channels fixed to 3 by the module
    pred = jax.random.normal(k1, (B, C, H, W), dtype=jnp.float32)
    label = jax.random.normal(k2, (B, C, H, W), dtype=jnp.float32)

    loss = jax.block_until_ready(sobel_criterium(pred, label, weight=1.0))
    ref = jax.block_until_ready(_reference(pred, label, weight=1.0))
    assert jnp.allclose(loss, ref, rtol=1e-4, atol=1e-4), (loss, ref)

    print("KERNEL_OK")
</pallas_src>

<mosaic_0001>
module attributes {stable_mosaic.version = 11 : i64} {
  func.func @sobel_loss_kernel(%arg0: i32, %arg1: memref<1x3x16x16xf32, #tpu.memory_space<vmem>>, %arg2: memref<1x3x16x16xf32, #tpu.memory_space<vmem>>, %arg3: memref<1x1x1xf32, #tpu.memory_space<vmem>>) attributes {dimension_semantics = [#tpu.dimension_semantics<parallel>], iteration_bounds = array<i64: 2>, scalar_prefetch = 0 : i64, scratch_operands = 0 : i64, tpu.core_type = #tpu.core_type<tc>, window_params = [{transform_indices = @transform_0, window_bounds = array<i64: 1, 3, 16, 16>}, {transform_indices = @transform_1, window_bounds = array<i64: 1, 3, 16, 16>}, {transform_indices = @transform_2, window_bounds = array<i64: 1, 1, 1>}]} {
    %cst = arith.constant 0.000000e+00 : f32
    %0 = vector.broadcast %cst : f32 to vector<1x1xf32>
    %c0 = arith.constant 0 : index
    %c0_0 = arith.constant 0 : index
    %c0_1 = arith.constant 0 : index
    %c0_2 = arith.constant 0 : index
    %1 = vector.load %arg1[%c0, %c0_0, %c0_1, %c0_2] : memref<1x3x16x16xf32, #tpu.memory_space<vmem>>, vector<1x1x16x16xf32>
    %2 = vector.shape_cast %1 : vector<1x1x16x16xf32> to vector<16x16xf32>
    %c0_3 = arith.constant 0 : index
    %c0_4 = arith.constant 0 : index
    %c0_5 = arith.constant 0 : index
    %c0_6 = arith.constant 0 : index
    %3 = vector.load %arg2[%c0_3, %c0_4, %c0_5, %c0_6] : memref<1x3x16x16xf32, #tpu.memory_space<vmem>>, vector<1x1x16x16xf32>
    %4 = vector.shape_cast %3 : vector<1x1x16x16xf32> to vector<16x16xf32>
    %5 = arith.subf %2, %4 : vector<16x16xf32>
    %c0_7 = arith.constant 0 : index
    %c1 = arith.constant 1 : index
    %c0_8 = arith.constant 0 : index
    %c0_9 = arith.constant 0 : index
    %6 = vector.load %arg1[%c0_7, %c1, %c0_8, %c0_9] : memref<1x3x16x16xf32, #tpu.memory_space<vmem>>, vector<1x1x16x16xf32>
    %7 = vector.shape_cast %6 : vector<1x1x16x16xf32> to vector<16x16xf32>
    %c0_10 = arith.constant 0 : index
    %c1_11 = arith.constant 1 : index
    %c0_12 = arith.constant 0 : index
    %c0_13 = arith.constant 0 : index
    %8 = vector.load %arg2[%c0_10, %c1_11, %c0_12, %c0_13] : memref<1x3x16x16xf32, #tpu.memory_space<vmem>>, vector<1x1x16x16xf32>
    %9 = vector.shape_cast %8 : vector<1x1x16x16xf32> to vector<16x16xf32>
    %10 = arith.subf %7, %9 : vector<16x16xf32>
    %11 = arith.addf %5, %10 : vector<16x16xf32>
    %c0_14 = arith.constant 0 : index
    %c2 = arith.constant 2 : index
    %c0_15 = arith.constant 0 : index
    %c0_16 = arith.constant 0 : index
    %12 = vector.load %arg1[%c0_14, %c2, %c0_15, %c0_16] : memref<1x3x16x16xf32, #tpu.memory_space<vmem>>, vector<1x1x16x16xf32>
    %13 = vector.shape_cast %12 : vector<1x1x16x16xf32> to vector<16x16xf32>
    %c0_17 = arith.constant 0 : index
    %c2_18 = arith.constant 2 : index
    %c0_19 = arith.constant 0 : index
    %c0_20 = arith.constant 0 : index
    %14 = vector.load %arg2[%c0_17, %c2_18, %c0_19, %c0_20] : memref<1x3x16x16xf32, #tpu.memory_space<vmem>>, vector<1x1x16x16xf32>
    %15 = vector.shape_cast %14 : vector<1x1x16x16xf32> to vector<16x16xf32>
    %16 = arith.subf %13, %15 : vector<16x16xf32>
    %17 = arith.addf %11, %16 : vector<16x16xf32>
    %cst_21 = arith.constant 0.000000e+00 : f32
    %18 = vector.broadcast %cst_21 : f32 to vector<16x1xf32>
    %cst_22 = arith.constant 0.000000e+00 : f32
    %19 = vector.broadcast %cst_22 : f32 to vector<1x18xf32>
    %20 = tpu.concatenate %18, %17, %18 in 1 : vector<16x1xf32>, vector<16x16xf32>, vector<16x1xf32> -> vector<16x18xf32>
    %21 = tpu.concatenate %19, %20, %19 in 0 : vector<1x18xf32>, vector<16x18xf32>, vector<1x18xf32> -> vector<18x18xf32>
    %22 = vector.extract_strided_slice %21 {offsets = [0, 0], sizes = [16, 18], strides = [1, 1]} : vector<18x18xf32> to vector<16x18xf32>
    %23 = vector.extract_strided_slice %21 {offsets = [1, 0], sizes = [16, 18], strides = [1, 1]} : vector<18x18xf32> to vector<16x18xf32>
    %cst_23 = arith.constant 2.000000e+00 : f32
    %24 = vector.broadcast %cst_23 : f32 to vector<16x18xf32>
    %25 = arith.mulf %24, %23 : vector<16x18xf32>
    %26 = arith.addf %22, %25 : vector<16x18xf32>
    %27 = vector.extract_strided_slice %21 {offsets = [2, 0], sizes = [16, 18], strides = [1, 1]} : vector<18x18xf32> to vector<16x18xf32>
    %28 = arith.addf %26, %27 : vector<16x18xf32>
    %29 = vector.extract_strided_slice %21 {offsets = [0, 0], sizes = [16, 18], strides = [1, 1]} : vector<18x18xf32> to vector<16x18xf32>
    %30 = vector.extract_strided_slice %21 {offsets = [2, 0], sizes = [16, 18], strides = [1, 1]} : vector<18x18xf32> to vector<16x18xf32>
    %31 = arith.subf %29, %30 : vector<16x18xf32>
    %32 = vector.extract_strided_slice %28 {offsets = [0, 0], sizes = [16, 16], strides = [1, 1]} : vector<16x18xf32> to vector<16x16xf32>
    %33 = vector.extract_strided_slice %28 {offsets = [0, 2], sizes = [16, 16], strides = [1, 1]} : vector<16x18xf32> to vector<16x16xf32>
    %34 = arith.subf %32, %33 : vector<16x16xf32>
    %35 = vector.extract_strided_slice %31 {offsets = [0, 0], sizes = [16, 16], strides = [1, 1]} : vector<16x18xf32> to vector<16x16xf32>
    %36 = vector.extract_strided_slice %31 {offsets = [0, 1], sizes = [16, 16], strides = [1, 1]} : vector<16x18xf32> to vector<16x16xf32>
    %cst_24 = arith.constant 2.000000e+00 : f32
    %37 = vector.broadcast %cst_24 : f32 to vector<16x16xf32>
    %38 = arith.mulf %37, %36 : vector<16x16xf32>
    %39 = arith.addf %35, %38 : vector<16x16xf32>
    %40 = vector.extract_strided_slice %31 {offsets = [0, 2], sizes = [16, 16], strides = [1, 1]} : vector<16x18xf32> to vector<16x16xf32>
    %41 = arith.addf %39, %40 : vector<16x16xf32>
    %42 = arith.mulf %34, %34 : vector<16x16xf32>
    %43 = arith.mulf %41, %41 : vector<16x16xf32>
    %44 = arith.addf %42, %43 : vector<16x16xf32>
    %45 = vector.shape_cast %44 : vector<16x16xf32> to vector<1x16x16xf32>
    %cst_25 = arith.constant dense<0.000000e+00> : vector<1xf32>
    %46 = vector.multi_reduction <add>, %45, %cst_25 [1, 2] : vector<1x16x16xf32> to vector<1xf32>
    %47 = vector.shape_cast %46 : vector<1xf32> to vector<1x1x1xf32>
    %48 = vector.extract %47[0, 0, 0] : f32 from vector<1x1x1xf32>
    %49 = vector.broadcast %48 : f32 to vector<1x1xf32>
    %50 = arith.addf %0, %49 : vector<1x1xf32>
    %51 = vector.shape_cast %50 : vector<1x1xf32> to vector<1x1x1xf32>
    %c0_26 = arith.constant 0 : index
    %c0_27 = arith.constant 0 : index
    %c0_28 = arith.constant 0 : index
    %52 = vector.load %arg3[%c0_26, %c0_27, %c0_28] : memref<1x1x1xf32, #tpu.memory_space<vmem>>, vector<1x1x1xf32>
    tpu.vector_store %arg3[%c0_26, %c0_27, %c0_28], %51 {strides = array<i32>} : memref<1x1x1xf32, #tpu.memory_space<vmem>>, vector<1x1x1xf32>,
    return
  }
  func.func @transform_0(%arg0: i32) -> (i32, i32, i32, i32) {
    %c0_i32 = arith.constant 0 : i32
    %c0_i32_0 = arith.constant 0 : i32
    %c0_i32_1 = arith.constant 0 : i32
    %c0_i32_2 = arith.constant 0 : i32
    return %arg0, %c0_i32, %c0_i32_0, %c0_i32_1 : i32, i32, i32, i32
  }
  func.func @transform_1(%arg0: i32) -> (i32, i32, i32, i32) {
    %c0_i32 = arith.constant 0 : i32
    %c0_i32_0 = arith.constant 0 : i32
    %c0_i32_1 = arith.constant 0 : i32
    %c0_i32_2 = arith.constant 0 : i32
    return %arg0, %c0_i32, %c0_i32_0, %c0_i32_1 : i32, i32, i32, i32
  }
  func.func @transform_2(%arg0: i32) -> (i32, i32, i32) {
    %c0_i32 = arith.constant 0 : i32
    %c0_i32_0 = arith.constant 0 : i32
    %c0_i32_1 = arith.constant 0 : i32
    return %arg0, %c0_i32, %c0_i32_0 : i32, i32, i32
  }
}

</mosaic_0001>

<llo_original>
// kernel: tpu_custom_call.1
$region0: #{tpu_custom_call.1}
  #allocation0 [shape = 'u32[]', space=smem, size = 0x4, offset = 0x4, fixed_abs, tag = 'smem constant byte address 0x4 - core index']
  #allocation1 [shape = 'u32[144,128]{1,0:T(1,128)}', space=vmem, size = 0x12000, scoped, tag = 'internal scratch']
  %s0 = inlined_call_operand.hbm [shape: f32[2,3,16,16], index: 0, kind: input, shape index: {}]
  %s1 = inlined_call_operand.hbm [shape: f32[2,3,16,16], index: 1, kind: input, shape index: {}]
  %s2 = inlined_call_operand.vmem [shape: f32[2,1,1], index: 2, kind: output, shape index: {}]
  %s3 = sld [smem:[#allocation0]]
  $region49: #{tpu_custom_call.1} parent=0
    _
  %s5 = ssub.s32 1, %s3
  %s6 = scalar_select 0, %s5, %s3
  $region1: #{tpu_custom_call.1} parent=0
    #allocation2 [shape = 'u8[49152]{0}', space=vmem, size = 0xc000, scoped, tag = 'input window, operand 0']
    #allocation3 [shape = 's32[2]{0}', space=sflag, size = 0x8, scoped, tag = 'scoped memory for tpu_custom_call.1']
    #allocation4 [shape = 'u8[49152]{0}', space=vmem, size = 0xc000, scoped, tag = 'input window, operand 1']
    #allocation5 [shape = 's32[2]{0}', space=sflag, size = 0x8, scoped, tag = 'scoped memory for tpu_custom_call.1']
    %7 = vsyncpa [#allocation3], 0
    %s8 = scalar_lea.sflag [#allocation3], 1
    %9 = vsyncpa %s8, 0
    %10 = vsyncpa [#allocation5], 0
    %s11 = scalar_lea.sflag [#allocation5], 1
    %12 = vsyncpa %s11, 0
    loop: start=0, step=1, limit=4
    $region2: #{tpu_custom_call.1} parent=1 // loop_pre_header
      _
    $region3: #{tpu_custom_call.1} parent=1 // loop_header
      %s14 = sphi 0, %s18
      %p15 = scmp.ge.s32.totalorder %s14, 4
      %s24 = sphi 0, %s26
      %s27 = sphi 0, %s24
      %s28 = sphi 0, %s27
      %s44 = sphi 0, %s28
      %s50 = sphi 0, %s52
      %s53 = sphi 0, %s50
      %s54 = sphi 0, %s53
      %s70 = sphi 0, %s54
      %s76 = sphi 0, %s78
      %s79 = sphi 0, %s76
      %s80 = sphi 0, %s79
      %s96 = sphi 0, %s80
    $region4: #{tpu_custom_call.1} parent=1 // loop_header_branch
      %17 = sbr.rel (%p15) target = $region8
    $region5: #{tpu_custom_call.1} parent=1 // loop_body
      %s19 = ssub.s32 %s14, 1
      %s20 = ssub.s32 %s14, 2
      %s21 = sadd.s32 %s14, 1
      %s22 = ssub.s32 %s14, %s21
      %p23 = scmp.eq.s32.totalorder %s22, 0
      %s25 = sadd.s32 %s24, 1
      %s26 = scalar_select %p23, %s24, %s25
      %p29 = pneg %p23
      %p30 = scmp.eq.s32.totalorder %s14, 1
      %p31 = por %p29, %p30
      %p32 = scmp.ne.s32.totalorder %s24, %s27
      %p33 = scmp.eq.s32.totalorder %s14, 0
      %p34 = por %p32, %p33
      %p35 = scmp.ne.s32.totalorder %s24, %s27
      %p36 = scmp.eq.s32.totalorder %s19, 1
      %p37 = por %p35, %p36
      %p38 = scmp.ne.s32.totalorder %s27, %s28
      %p39 = scmp.eq.s32.totalorder %s19, 0
      %p40 = por %p38, %p39
      %p41 = scmp.ne.s32.totalorder %s27, %s28
      %p42 = scmp.eq.s32.totalorder %s20, 1
      %p43 = por %p41, %p42
      %p45 = scmp.ne.s32.totalorder %s28, %s44
      %p46 = scmp.eq.s32.totalorder %s20, 0
      %p47 = por %p45, %p46
      %s48 = ssub.s32 %s14, %s21
      %p49 = scmp.eq.s32.totalorder %s48, 0
      %s51 = sadd.s32 %s50, 1
      %s52 = scalar_select %p49, %s50, %s51
      %p55 = pneg %p49
      %p56 = scmp.eq.s32.totalorder %s14, 1
      %p57 = por %p55, %p56
      %p58 = scmp.ne.s32.totalorder %s50, %s53
      %p59 = scmp.eq.s32.totalorder %s14, 0
      %p60 = por %p58, %p59
      %p61 = scmp.ne.s32.totalorder %s50, %s53
      %p62 = scmp.eq.s32.totalorder %s19, 1
      %p63 = por %p61, %p62
      %p64 = scmp.ne.s32.totalorder %s53, %s54
      %p65 = scmp.eq.s32.totalorder %s19, 0
      %p66 = por %p64, %p65
      %p67 = scmp.ne.s32.totalorder %s53, %s54
      %p68 = scmp.eq.s32.totalorder %s20, 1
      %p69 = por %p67, %p68
      %p71 = scmp.ne.s32.totalorder %s54, %s70
      %p72 = scmp.eq.s32.totalorder %s20, 0
      %p73 = por %p71, %p72
      %s74 = ssub.s32 %s14, %s21
      %p75 = scmp.eq.s32.totalorder %s74, 0
      %s77 = sadd.s32 %s76, 1
      %s78 = scalar_select %p75, %s76, %s77
      %p81 = pneg %p75
      %p82 = scmp.eq.s32.totalorder %s14, 1
      %p83 = por %p81, %p82
      %p84 = scmp.ne.s32.totalorder %s76, %s79
      %p85 = scmp.eq.s32.totalorder %s14, 0
      %p86 = por %p84, %p85
      %p87 = scmp.ne.s32.totalorder %s76, %s79
      %p88 = scmp.eq.s32.totalorder %s19, 1
      %p89 = por %p87, %p88
      %p90 = scmp.ne.s32.totalorder %s79, %s80
      %p91 = scmp.eq.s32.totalorder %s19, 0
      %p92 = por %p90, %p91
      %p93 = scmp.ne.s32.totalorder %s79, %s80
      %p94 = scmp.eq.s32.totalorder %s20, 1
      %p95 = por %p93, %p94
      %p97 = scmp.ne.s32.totalorder %s80, %s96
      %p98 = scmp.eq.s32.totalorder %s20, 0
      %p99 = por %p97, %p98
      %p100 = scmp.le.s32.totalorder 1, %s14
      %p101 = scmp.lt.s32.totalorder %s14, 3
      %p102 = pnand %p100, %p101
      %p103 = pneg %p102
      // Predicated region
      $region9: #{tpu_custom_call.1} parent=5 // pred_check
        _
      $region10: #{tpu_custom_call.1} parent=5 // pred_check_branch
        %105 = sbr.rel (%p102) target = $region12
      $region11: #{tpu_custom_call.1} parent=5 // pred_region
        %s106 = ssub.s32 %s14, 1
      $region12: #{tpu_custom_call.1} parent=5 // pred_fallthru
        _
      %p107 = scmp.lt.s32.totalorder %s14, 2
      // Predicated region
      $region13: #{tpu_custom_call.1} parent=5 // pred_check
        %p108 = pneg %p107
      $region14: #{tpu_custom_call.1} parent=5 // pred_check_branch
        %110 = sbr.rel (%p108) target = $region16
      $region15: #{tpu_custom_call.1} parent=5 // pred_region
        // Predicated region
        $region17: #{tpu_custom_call.1} parent=15 // pred_check
          %p111 = pneg %p34
        $region18: #{tpu_custom_call.1} parent=15 // pred_check_branch
          %113 = sbr.rel (%p111) target = $region20
        $region19: #{tpu_custom_call.1} parent=15 // pred_region
          %s114 = sand.u32 %s24, 1
          %s115 = scalar_lea.sflag [#allocation3], %s114
          %s116 = sand.u32 %s24, 1
          %s117 = smul.addr %s116, 48
          %s118 = scalar_lea.vmem [#allocation2], %s117
          %s120 = ssub.s32 768, 768
          %121 = vsyncadd %s115, %s120
          %s122 = smul.addr %s14, 6
          %s123 = smul.addr %s122, 128
          %s124 = scalar_lea.hbm %s0, %s123
          %s125 = sshll.u32 %s118, 4
          %s126 = int_to_ptr.vmem [resolvable:$true] %s125
          %131 = dma.hbm_to_vmem [thread:$0]  %s124, 768, %s126, %s115, 128, 128, 8
        $region20: #{tpu_custom_call.1} parent=15 // pred_fallthru
          _
        // Predicated region
        $region21: #{tpu_custom_call.1} parent=15 // pred_check
          %p132 = pneg %p60
        $region22: #{tpu_custom_call.1} parent=15 // pred_check_branch
          %134 = sbr.rel (%p132) target = $region24
        $region23: #{tpu_custom_call.1} parent=15 // pred_region
          %s135 = sand.u32 %s50, 1
          %s136 = scalar_lea.sflag [#allocation5], %s135
          %s137 = sand.u32 %s50, 1
          %s138 = smul.addr %s137, 48
          %s139 = scalar_lea.vmem [#allocation4], %s138
          %s141 = ssub.s32 768, 768
          %142 = vsyncadd %s136, %s141
          %s143 = smul.addr %s14, 6
          %s144 = smul.addr %s143, 128
          %s145 = scalar_lea.hbm %s1, %s144
          %s146 = sshll.u32 %s139, 4
          %s147 = int_to_ptr.vmem [resolvable:$true] %s146
          %152 = dma.hbm_to_vmem [thread:$0]  %s145, 768, %s147, %s136, 128, 128, 8
        $region24: #{tpu_custom_call.1} parent=15 // pred_fallthru
          _
      $region16: #{tpu_custom_call.1} parent=5 // pred_fallthru
        _
      %p153 = scmp.le.s32.totalorder 1, %s14
      %p154 = scmp.lt.s32.totalorder %s14, 3
      %p155 = pnand %p153, %p154
      %p156 = pneg %p155
      // Predicated region
      $region25: #{tpu_custom_call.1} parent=5 // pred_check
        _
      $region26: #{tpu_custom_call.1} parent=5 // pred_check_branch
        %158 = sbr.rel (%p155) target = $region28
      $region27: #{tpu_custom_call.1} parent=5 // pred_region
        %s159 = ssub.s32 %s14, 1
        %s160 = sand.u32 %s27, 1
        %s161 = scalar_lea.sflag [#allocation3], %s160
        %s162 = sand.u32 %s27, 1
        %s163 = smul.addr %s162, 48
        %s164 = scalar_lea.vmem [#allocation2], %s163
        // Predicated region
        $region29: #{tpu_custom_call.1} parent=27 // pred_check
          %p165 = pneg %p40
        $region30: #{tpu_custom_call.1} parent=27 // pred_check_branch
          %167 = sbr.rel (%p165) target = $region32
        $region31: #{tpu_custom_call.1} parent=27 // pred_region
          %168 = dma.done %s161, 768
        $region32: #{tpu_custom_call.1} parent=27 // pred_fallthru
          _
        %s169 = sand.u32 %s53, 1
        %s170 = scalar_lea.sflag [#allocation5], %s169
        %s171 = sand.u32 %s53, 1
        %s172 = smul.addr %s171, 48
        %s173 = scalar_lea.vmem [#allocation4], %s172
        // Predicated region
        $region33: #{tpu_custom_call.1} parent=27 // pred_check
          %p174 = pneg %p66
        $region34: #{tpu_custom_call.1} parent=27 // pred_check_branch
          %176 = sbr.rel (%p174) target = $region36
        $region35: #{tpu_custom_call.1} parent=27 // pred_region
          %177 = dma.done %s170, 768
        $region36: #{tpu_custom_call.1} parent=27 // pred_fallthru
          _
        %s178 = sand.u32 %s27, 1
        %s179 = scalar_lea.sflag [#allocation3], %s178
        %s180 = sand.u32 %s27, 1
        %s181 = smul.addr %s180, 48
        %s182 = scalar_lea.vmem [#allocation2], %s181
        %p183 = pneg %p40
        %p184 = pneg %p37
        %s185 = sand.u32 %s53, 1
        %s186 = scalar_lea.sflag [#allocation5], %s185
        %s187 = sand.u32 %s53, 1
        %s188 = smul.addr %s187, 48
        %s189 = scalar_lea.vmem [#allocation4], %s188
        %p190 = pneg %p66
        %p191 = pneg %p63
        %p192 = pneg %p92
        %p193 = pneg %p89
        %p194 = scmp.lt.s32.totalorder %s19, 1
        %s195 = scalar_select %p194, %s19, 1
        %s196 = scalar_lea.vmem %s2, %s195
        %p197 = scmp.lt.s32.totalorder %s19, 1
        %s198 = scalar_select %p197, %s19, 1
        %s199 = scalar_lea.vmem %s2, %s198
        %v200 = vld [vmem:[%s164] sm:$0xff]
        %v201 = vld [vmem:[%s164 + $0x8] sm:$0xff]
        %v202 = vld [vmem:[%s173] sm:$0xff]
        %v203 = vld [vmem:[%s173 + $0x8] sm:$0xff]
        %v204 = vsub.f32 %v200, %v202
        %v205 = vsub.f32 %v201, %v203
        %s206 = scalar_lea.vmem %s164, 16 [#allocation2]
        %v207 = vld [vmem:[%s206] sm:$0xff]
        %v208 = vld [vmem:[%s206 + $0x8] sm:$0xff]
        %s209 = scalar_lea.vmem %s173, 16 [#allocation4]
        %v210 = vld [vmem:[%s209] sm:$0xff]
        %v211 = vld [vmem:[%s209 + $0x8] sm:$0xff]
        %v212 = vsub.f32 %v207, %v210
        %v213 = vsub.f32 %v208, %v211
        %v214 = vadd.f32 %v204, %v212
        %v215 = vadd.f32 %v205, %v213
        %s216 = scalar_lea.vmem %s164, 32 [#allocation2]
        %v217 = vld [vmem:[%s216] sm:$0xff]
        %v218 = vld [vmem:[%s216 + $0x8] sm:$0xff]
        %s219 = scalar_lea.vmem %s173, 32 [#allocation4]
        %v220 = vld [vmem:[%s219] sm:$0xff]
        %v221 = vld [vmem:[%s219 + $0x8] sm:$0xff]
        %v222 = vsub.f32 %v217, %v220
        %v223 = vsub.f32 %v218, %v221
        %v224 = vadd.f32 %v214, %v222
        %v225 = vadd.f32 %v215, %v223
        %228 = vrot.lane.b32.xlu0 %v224, 1
        %v229 = vpop.permute.xlu0 %228
        %230 = vrot.lane.b32.xlu0 %v225, 1
        %v231 = vpop.permute.xlu0 %230
        %vm234 = vcmask 7168
        %v235 = vsel %vm234, 0.0, %v229
        %v236 = vsel %vm234, 0.0, %v231
        %vm237 = vcmask 138240
        %v238 = vsel %vm237, %v235, 0.0
        %v239 = vsel %vm237, %v236, 0.0
        %vm242 = vcmask 1040384
        %v243 = vrot.slane %v238, 7
        %v244 = vrot.slane %v239, 7
        %v245 = vsel %vm242, %v243, %v244
        %v249 = vsel %vm242, 0.0, %v243
        %v250 = vsel %vm242, %v244, 0.0
        %v251 = vmul.f32 %v249, 2.0
        %v252 = vmul.f32 %v245, 2.0
        %v253 = vmul.f32 %v250, 2.0
        %vm257 = vcmask 1046528
        %v258 = vrot.slane %v251, 1
        %v259 = vrot.slane %v252, 1
        %v260 = vsel %vm257, %v258, %v259
        %v261 = vrot.slane %v253, 1
        %v262 = vsel %vm257, %v259, %v261
        %v265 = vadd.f32 %v249, %v260
        %v266 = vadd.f32 %v245, %v262
        %vm269 = vcmask 1045504
        %v270 = vrot.slane %v249, 2
        %v271 = vrot.slane %v245, 2
        %v272 = vsel %vm269, %v270, %v271
        %v273 = vrot.slane %v250, 2
        %v274 = vsel %vm269, %v271, %v273
        %v277 = vadd.f32 %v265, %v272
        %v278 = vadd.f32 %v266, %v274
        %v279 = vsub.f32 %v249, %v272
        %v280 = vsub.f32 %v245, %v274
        %283 = vrot.lane.b32.xlu0 %v277, 126
        %v284 = vpop.permute.xlu0 %283
        %285 = vrot.lane.b32.xlu0 %v278, 126
        %v286 = vpop.permute.xlu0 %285
        %v289 = vsub.f32 %v277, %v284
        %v290 = vsub.f32 %v278, %v286
        %v291 = vmul.f32 %v279, 2.0
        %v292 = vmul.f32 %v280, 2.0
        %295 = vrot.lane.b32.xlu0 %v291, 127
        %v296 = vpop.permute.xlu0 %295
        %297 = vrot.lane.b32.xlu0 %v292, 127
        %v298 = vpop.permute.xlu0 %297
        %v301 = vadd.f32 %v279, %v296
        %v302 = vadd.f32 %v280, %v298
        %305 = vrot.lane.b32.xlu0 %v279, 126
        %v306 = vpop.permute.xlu0 %305
        %307 = vrot.lane.b32.xlu0 %v280, 126
        %v308 = vpop.permute.xlu0 %307
        %v311 = vadd.f32 %v301, %v306
        %v312 = vadd.f32 %v302, %v308
        %v313 = vmul.f32 %v289, %v289
        %v314 = vmul.f32 %v290, %v290
        %v315 = vmul.f32 %v311, %v311
        %v316 = vmul.f32 %v312, %v312
        %v317 = vadd.f32 %v313, %v315
        %v318 = vadd.f32 %v314, %v316
        %vm319 = vcmask 130048
        %v320 = vsel %vm319, %v317, 0.0
        %v321 = vsel %vm319, %v318, 0.0
        %v322 = vadd.f32 %v320, %v321
        %323 = vadd.xlane.f32.xlu0 %v322
        %v324 = vpop.xlane.xlu0 %323
        %v325 = vrot.slane %v324, 4
        %v326 = vadd.f32 %v324, %v325
        %v327 = vrot.slane %v326, 2
        %v328 = vadd.f32 %v326, %v327
        %v329 = vrot.slane %v328, 1
        %v330 = vadd.f32 %v328, %v329
        %s331 = vtos %v330
        %v332 = vstv %s331
        %v333 = vadd.f32 %v332, 0.0
        %vm334 = vcmask 0
        %335 = vst.msk [vmem:[%s199] sm:$0x1] %vm334, %v333
        %p336 = scmp.lt.s32.totalorder %s19, 1
        %s337 = scalar_select %p336, %s19, 1
        %s338 = scalar_lea.vmem %s2, %s337
        // Predicated region
        $region37: #{tpu_custom_call.1} parent=27 // pred_check
          %p339 = pneg %p89
        $region38: #{tpu_custom_call.1} parent=27 // pred_check_branch
          %341 = sbr.rel (%p339) target = $region40
        $region39: #{tpu_custom_call.1} parent=27 // pred_region
          _
        $region40: #{tpu_custom_call.1} parent=27 // pred_fallthru
          _
      $region28: #{tpu_custom_call.1} parent=5 // pred_fallthru
        _
      %p342 = scmp.le.s32.totalorder 2, %s14
      // Predicated region
      $region41: #{tpu_custom_call.1} parent=5 // pred_check
        %p343 = pneg %p342
      $region42: #{tpu_custom_call.1} parent=5 // pred_check_branch
        %345 = sbr.rel (%p343) target = $region44
      $region43: #{tpu_custom_call.1} parent=5 // pred_region
        %s346 = ssub.s32 %s14, 2
        // Predicated region
        $region45: #{tpu_custom_call.1} parent=43 // pred_check
          %p347 = pneg %p95
        $region46: #{tpu_custom_call.1} parent=43 // pred_check_branch
          %349 = sbr.rel (%p347) target = $region48
        $region47: #{tpu_custom_call.1} parent=43 // pred_region
          %p350 = scmp.lt.s32.totalorder %s20, 1
          %s351 = scalar_select %p350, %s20, 1
          %s352 = scalar_lea.vmem %s2, %s351
        $region48: #{tpu_custom_call.1} parent=43 // pred_fallthru
          _
      $region44: #{tpu_custom_call.1} parent=5 // pred_fallthru
        _
    $region6: #{tpu_custom_call.1} parent=1 // loop_footer
      %s18 = sadd.s32 1, %s14
    $region7: #{tpu_custom_call.1} parent=1 // loop_footer_branch
      %13 = sbr.rel target = $region3
    $region8: #{tpu_custom_call.1} parent=1 // loop_exit
      _
    %353 = vsyncpa [#allocation3], 1
    %s354 = scalar_lea.sflag [#allocation3], 1
    %355 = vsyncpa %s354, 1
    %356 = vsyncpa [#allocation5], 1
    %s357 = scalar_lea.sflag [#allocation5], 1
    %358 = vsyncpa %s357, 1

</llo_original>
